<compile_context>
chip_gen: v5e
topology: v5e:2x2
jax: 0.10.0
libtpu: 0.0.40
codegen_flags: <defaults>
</compile_context>

<pallas_src>
import functools

import jax
import jax.numpy as jnp
from jax.experimental import pallas as pl
from jax.experimental.pallas import tpu as pltpu

H_IN = 2      # input features
H_HID = 1000  # logical hidden size (matches nn.Linear(2, 1000))
H_PAD = 1024  # hidden padded to a multiple of 128 lanes (zero-padded -> numerically free)


def _small_ann_kernel(x_ref, w1_ref, b1_ref, w2_ref, b2_ref, o_ref):
    # ---- Layer 1: Linear(2, H) as two VPU broadcast-FMAs (K=2 would waste the MXU) ----
    #   h[b, j] = x[b, 0] * w1[0, j] + x[b, 1] * w1[1, j] + b1[j]
    x0 = x_ref[:, 0:1]                                   # [TB, 1]
    x1 = x_ref[:, 1:2]                                   # [TB, 1]
    h = x0 * w1_ref[0:1, :] + x1 * w1_ref[1:2, :] + b1_ref[...]   # [TB, H_PAD]
    h = jnp.maximum(h, 0.0)                              # ReLU

    # ---- Layer 2: Linear(H, 1) as VPU multiply + XLU lane reduce (N=1 wastes the MXU) ----
    #   y[b] = sum_j h[b, j] * w2[j] + b2
    y = jnp.sum(h * w2_ref[...], axis=-1, keepdims=True) + b2_ref[...]   # [TB, 1]

    # Sigmoid (exp on the EUP), write output tile.
    o_ref[...] = jax.nn.sigmoid(y).astype(o_ref.dtype)


def _round_up(x, m):
    return (x + m - 1) // m * m


@functools.partial(jax.jit, static_argnames=("block_b",))
def small_ann_forward(x, w1, b1, w2, b2, *, block_b=1024):
    """Forward pass.

    x : [B, 2]        f32
    w1: [2, H_PAD]    f32  (transposed vs torch's [out, in], zero-padded 1000 -> 1024)
    b1: [1, H_PAD]    f32
    w2: [1, H_PAD]    f32  (lane-major row, zero-padded)
    b2: [1, 1]        f32
    returns [B, 1]    f32
    """
    B = x.shape[0]
    # Pick the batch tile: whole (8-aligned) batch if it is small, else block_b.
    if B <= block_b:
        tb = _round_up(max(B, 1), 8)
    else:
        tb = block_b
    b_pad = _round_up(B, tb)
    if b_pad != B:
        x = jnp.pad(x, ((0, b_pad - B), (0, 0)))
    grid = (b_pad // tb,)

    flops = 2 * b_pad * (H_IN * H_PAD + H_PAD)  # two FMAs/elem + weighted reduce
    bytes_accessed = 4 * (b_pad * H_IN + H_IN * H_PAD + 2 * H_PAD + 1 + b_pad)

    out = pl.pallas_call(
        _small_ann_kernel,
        out_shape=jax.ShapeDtypeStruct((b_pad, 1), jnp.float32),
        grid_spec=pltpu.PrefetchScalarGridSpec(
            num_scalar_prefetch=0,
            grid=grid,
            in_specs=[
                pl.BlockSpec((tb, H_IN), lambda i: (i, 0)),     # x tile streams with the grid
                pl.BlockSpec((H_IN, H_PAD), lambda i: (0, 0)),  # w1 resident
                pl.BlockSpec((1, H_PAD), lambda i: (0, 0)),     # b1 resident
                pl.BlockSpec((1, H_PAD), lambda i: (0, 0)),     # w2 resident (lane-major row)
                pl.BlockSpec((1, 1), lambda i: (0, 0)),         # b2 resident
            ],
            out_specs=pl.BlockSpec((tb, 1), lambda i: (i, 0)),
        ),
        compiler_params=pltpu.CompilerParams(
            dimension_semantics=("parallel",),
        ),
        cost_estimate=pl.CostEstimate(
            flops=flops, transcendentals=b_pad, bytes_accessed=bytes_accessed
        ),
    )(x, w1, b1, w2, b2)
    return out[:B]


def init_params(key):
    """Deterministic init mimicking PyTorch nn.Linear default (uniform +/- 1/sqrt(fan_in)),
    stored directly in the kernel layout and zero-padded along the hidden dim."""
    k1, k2, k3, k4 = jax.random.split(key, 4)
    bound1 = 1.0 / jnp.sqrt(H_IN)
    bound2 = 1.0 / jnp.sqrt(H_HID)
    w1 = jax.random.uniform(k1, (H_IN, H_HID), jnp.float32, -bound1, bound1)
    b1 = jax.random.uniform(k2, (1, H_HID), jnp.float32, -bound1, bound1)
    w2 = jax.random.uniform(k3, (1, H_HID), jnp.float32, -bound2, bound2)
    b2 = jax.random.uniform(k4, (1, 1), jnp.float32, -bound2, bound2)
    pad = H_PAD - H_HID
    w1 = jnp.pad(w1, ((0, 0), (0, pad)))
    b1 = jnp.pad(b1, ((0, 0), (0, pad)))
    w2 = jnp.pad(w2, ((0, 0), (0, pad)))
    return w1, b1, w2, b2


def reference_forward(x, w1, b1, w2, b2):
    h = jnp.maximum(x @ w1 + b1, 0.0)
    y = jnp.sum(h * w2, axis=-1, keepdims=True) + b2
    return jax.nn.sigmoid(y)


if __name__ == "__main__":
    key = jax.random.PRNGKey(0)
    kx, kp = jax.random.split(key)
    batch = 8
    x = jax.random.normal(kx, (batch, H_IN), jnp.float32)
    w1, b1, w2, b2 = init_params(kp)

    out = small_ann_forward(x, w1, b1, w2, b2)
    out = jax.block_until_ready(out)

    ref = reference_forward(x, w1, b1, w2, b2)
    assert out.shape == (batch, 1)
    assert jnp.allclose(out, ref, atol=1e-5, rtol=1e-5), float(jnp.max(jnp.abs(out - ref)))

    print("KERNEL_OK")
</pallas_src>

<mosaic_0001>
module attributes {stable_mosaic.version = 11 : i64} {
  func.func @_small_ann_kernel(%arg0: i32, %arg1: memref<8x2xf32, #tpu.memory_space<vmem>>, %arg2: memref<2x1024xf32, #tpu.memory_space<vmem>>, %arg3: memref<1x1024xf32, #tpu.memory_space<vmem>>, %arg4: memref<1x1024xf32, #tpu.memory_space<vmem>>, %arg5: memref<1x1xf32, #tpu.memory_space<vmem>>, %arg6: memref<8x1xf32, #tpu.memory_space<vmem>>) attributes {dimension_semantics = [#tpu.dimension_semantics<parallel>], iteration_bounds = array<i64: 1>, scalar_prefetch = 0 : i64, scratch_operands = 0 : i64, tpu.core_type = #tpu.core_type<tc>, window_params = [{transform_indices = @transform_0, window_bounds = array<i64: 8, 2>}, {pipeline_mode = #tpu.pipeline_mode<synchronous>, transform_indices = @transform_1, window_bounds = array<i64: 2, 1024>}, {pipeline_mode = #tpu.pipeline_mode<synchronous>, transform_indices = @transform_2, window_bounds = array<i64: 1, 1024>}, {pipeline_mode = #tpu.pipeline_mode<synchronous>, transform_indices = @transform_3, window_bounds = array<i64: 1, 1024>}, {pipeline_mode = #tpu.pipeline_mode<synchronous>, transform_indices = @transform_4, window_bounds = array<i64: 1, 1>}, {transform_indices = @transform_5, window_bounds = array<i64: 8, 1>}]} {
    %c0 = arith.constant 0 : index
    %c0_0 = arith.constant 0 : index
    %0 = vector.load %arg1[%c0, %c0_0] : memref<8x2xf32, #tpu.memory_space<vmem>>, vector<8x1xf32>
    %c0_1 = arith.constant 0 : index
    %c1 = arith.constant 1 : index
    %1 = vector.load %arg1[%c0_1, %c1] : memref<8x2xf32, #tpu.memory_space<vmem>>, vector<8x1xf32>
    %c0_2 = arith.constant 0 : index
    %c0_3 = arith.constant 0 : index
    %2 = vector.load %arg2[%c0_2, %c0_3] : memref<2x1024xf32, #tpu.memory_space<vmem>>, vector<1x1024xf32>
    %3 = vector.broadcast %0 : vector<8x1xf32> to vector<8x1024xf32>
    %4 = vector.broadcast %2 : vector<1x1024xf32> to vector<8x1024xf32>
    %5 = arith.mulf %3, %4 : vector<8x1024xf32>
    %c1_4 = arith.constant 1 : index
    %c0_5 = arith.constant 0 : index
    %6 = vector.load %arg2[%c1_4, %c0_5] : memref<2x1024xf32, #tpu.memory_space<vmem>>, vector<1x1024xf32>
    %7 = vector.broadcast %1 : vector<8x1xf32> to vector<8x1024xf32>
    %8 = vector.broadcast %6 : vector<1x1024xf32> to vector<8x1024xf32>
    %9 = arith.mulf %7, %8 : vector<8x1024xf32>
    %10 = arith.addf %5, %9 : vector<8x1024xf32>
    %c0_6 = arith.constant 0 : index
    %c0_7 = arith.constant 0 : index
    %11 = vector.load %arg3[%c0_6, %c0_7] : memref<1x1024xf32, #tpu.memory_space<vmem>>, vector<1x1024xf32>
    %12 = vector.broadcast %11 : vector<1x1024xf32> to vector<8x1024xf32>
    %13 = arith.addf %10, %12 : vector<8x1024xf32>
    %cst = arith.constant 0.000000e+00 : f32
    %14 = vector.broadcast %cst : f32 to vector<8x1024xf32>
    %15 = arith.maximumf %13, %14 : vector<8x1024xf32>
    %c0_8 = arith.constant 0 : index
    %c0_9 = arith.constant 0 : index
    %16 = vector.load %arg4[%c0_8, %c0_9] : memref<1x1024xf32, #tpu.memory_space<vmem>>, vector<1x1024xf32>
    %17 = vector.broadcast %16 : vector<1x1024xf32> to vector<8x1024xf32>
    %18 = arith.mulf %15, %17 : vector<8x1024xf32>
    %cst_10 = arith.constant dense<0.000000e+00> : vector<8xf32>
    %19 = vector.multi_reduction <add>, %18, %cst_10 [1] : vector<8x1024xf32> to vector<8xf32>
    %20 = vector.shape_cast %19 : vector<8xf32> to vector<8x1xf32>
    %c0_11 = arith.constant 0 : index
    %c0_12 = arith.constant 0 : index
    %21 = vector.load %arg5[%c0_11, %c0_12] : memref<1x1xf32, #tpu.memory_space<vmem>>, vector<1x1xf32>
    %22 = vector.broadcast %21 : vector<1x1xf32> to vector<8x1xf32>
    %23 = arith.addf %20, %22 : vector<8x1xf32>
    %24 = arith.negf %23 : vector<8x1xf32>
    %25 = math.exp %24 : vector<8x1xf32>
    %cst_13 = arith.constant 1.000000e+00 : f32
    %26 = vector.broadcast %cst_13 : f32 to vector<8x1xf32>
    %27 = arith.addf %26, %25 : vector<8x1xf32>
    %28 = arith.divf %26, %27 : vector<8x1xf32>
    %c0_14 = arith.constant 0 : index
    %c0_15 = arith.constant 0 : index
    %29 = vector.load %arg6[%c0_14, %c0_15] : memref<8x1xf32, #tpu.memory_space<vmem>>, vector<8x1xf32>
    tpu.vector_store %arg6[%c0_14, %c0_15], %28 {strides = array<i32>} : memref<8x1xf32, #tpu.memory_space<vmem>>, vector<8x1xf32>,
    return
  }
  func.func @transform_0(%arg0: i32) -> (i32, i32) {
    %c0_i32 = arith.constant 0 : i32
    %c0_i32_0 = arith.constant 0 : i32
    return %arg0, %c0_i32 : i32, i32
  }
  func.func @transform_1(%arg0: i32) -> (i32, i32) {
    %c0_i32 = arith.constant 0 : i32
    %c0_i32_0 = arith.constant 0 : i32
    %c0_i32_1 = arith.constant 0 : i32
    return %c0_i32, %c0_i32_0 : i32, i32
  }
  func.func @transform_2(%arg0: i32) -> (i32, i32) {
    %c0_i32 = arith.constant 0 : i32
    %c0_i32_0 = arith.constant 0 : i32
    %c0_i32_1 = arith.constant 0 : i32
    return %c0_i32, %c0_i32_0 : i32, i32
  }
  func.func @transform_3(%arg0: i32) -> (i32, i32) {
    %c0_i32 = arith.constant 0 : i32
    %c0_i32_0 = arith.constant 0 : i32
    %c0_i32_1 = arith.constant 0 : i32
    return %c0_i32, %c0_i32_0 : i32, i32
  }
  func.func @transform_4(%arg0: i32) -> (i32, i32) {
    %c0_i32 = arith.constant 0 : i32
    %c0_i32_0 = arith.constant 0 : i32
    %c0_i32_1 = arith.constant 0 : i32
    return %c0_i32, %c0_i32_0 : i32, i32
  }
  func.func @transform_5(%arg0: i32) -> (i32, i32) {
    %c0_i32 = arith.constant 0 : i32
    %c0_i32_0 = arith.constant 0 : i32
    return %arg0, %c0_i32 : i32, i32
  }
}

</mosaic_0001>

<llo_original>
// kernel: small_ann_forward.1
$region0: #{small_ann_forward.1}
  #allocation0 [shape = 'u32[]', space=smem, size = 0x4, offset = 0x4, fixed_abs, tag = 'smem constant byte address 0x4 - core index']
  #allocation1 [shape = 'u32[72,128]{1,0:T(1,128)}', space=vmem, size = 0x9000, scoped, tag = 'internal scratch']
  #allocation2 [shape = 'f32[1,1]{1,0:T(1,128)S(1)}', space=vmem, size = 0x200, scoped, tag = 'scoped memory for small_ann_forward.1']
  %s0 = inlined_call_operand.vmem [shape: f32[8,2], index: 0, kind: input, shape index: {}]
  %s1 = inlined_call_operand.hbm [shape: f32[2,1024], index: 1, kind: input, shape index: {}]
  %s2 = inlined_call_operand.vmem [shape: f32[1,1024], index: 2, kind: input, shape index: {}]
  %s3 = inlined_call_operand.hbm [shape: f32[1,1024], index: 3, kind: input, shape index: {}]
  %s4 = inlined_call_operand.<no memory space> [shape: f32[1,1], index: 4, kind: input, shape index: {}]
  %s5 = inlined_call_operand.vmem [shape: f32[8,1], index: 5, kind: output, shape index: {}]
  %s6 = sld [smem:[#allocation0]]
  $region38: #{small_ann_forward.1} parent=0
    _
  %s8 = ssub.s32 1, %s6
  %s9 = scalar_select 0, %s8, %s6
  %v10 = vstv %s4
  %11 = vst [vmem:[#allocation2] sm:$0x1] %v10
  $region1: #{small_ann_forward.1} parent=0
    #allocation3 [shape = 'u8[8192]{0}', space=vmem, size = 0x2000, scoped, tag = 'input window, operand 1, single buffered']
    #allocation4 [shape = 's32[1]{0}', space=sflag, size = 0x4, scoped, tag = 'scoped memory for small_ann_forward.1']
    #allocation5 [shape = 'u8[4096]{0}', space=vmem, size = 0x1000, scoped, tag = 'input window, operand 3, single buffered']
    #allocation6 [shape = 's32[1]{0}', space=sflag, size = 0x4, scoped, tag = 'scoped memory for small_ann_forward.1']
    %12 = vsyncpa [#allocation4], 0
    %13 = vsyncpa [#allocation6], 0
    // Predicated region
    $region2: #{small_ann_forward.1} parent=1 // pred_check
      _
    $region3: #{small_ann_forward.1} parent=1 // pred_check_branch
      %15 = sbr.rel (0) target = $region5
    $region4: #{small_ann_forward.1} parent=1 // pred_region
      _
    $region5: #{small_ann_forward.1} parent=1 // pred_fallthru
      _
    // Predicated region
    $region6: #{small_ann_forward.1} parent=1 // pred_check
      _
    $region7: #{small_ann_forward.1} parent=1 // pred_check_branch
      %17 = sbr.rel (0) target = $region9
    $region8: #{small_ann_forward.1} parent=1 // pred_region
      %19 = vsyncadd [#allocation4], 0
      %s21 = sshll.u32 %s1, 4
      %s22 = int_to_ptr.hbm [resolvable:$true] %s21
      %s23 = sshll.u32 [#allocation3], 4
      %s24 = int_to_ptr.vmem [resolvable:$true] %s23
      %26 = dma.hbm_to_vmem [thread:$0]  %s22, 256, %s24, [#allocation4]
    $region9: #{small_ann_forward.1} parent=1 // pred_fallthru
      _
    // Predicated region
    $region10: #{small_ann_forward.1} parent=1 // pred_check
      _
    $region11: #{small_ann_forward.1} parent=1 // pred_check_branch
      %28 = sbr.rel (0) target = $region13
    $region12: #{small_ann_forward.1} parent=1 // pred_region
      _
    $region13: #{small_ann_forward.1} parent=1 // pred_fallthru
      _
    // Predicated region
    $region14: #{small_ann_forward.1} parent=1 // pred_check
      _
    $region15: #{small_ann_forward.1} parent=1 // pred_check_branch
      %30 = sbr.rel (0) target = $region17
    $region16: #{small_ann_forward.1} parent=1 // pred_region
      %32 = vsyncadd [#allocation6], 0
      %s34 = sshll.u32 %s3, 4
      %s35 = int_to_ptr.hbm [resolvable:$true] %s34
      %s36 = sshll.u32 [#allocation5], 4
      %s37 = int_to_ptr.vmem [resolvable:$true] %s36
      %39 = dma.hbm_to_vmem [thread:$0]  %s35, 128, %s37, [#allocation6]
    $region17: #{small_ann_forward.1} parent=1 // pred_fallthru
      _
    // Predicated region
    $region18: #{small_ann_forward.1} parent=1 // pred_check
      _
    $region19: #{small_ann_forward.1} parent=1 // pred_check_branch
      %41 = sbr.rel (0) target = $region21
    $region20: #{small_ann_forward.1} parent=1 // pred_region
      _
    $region21: #{small_ann_forward.1} parent=1 // pred_fallthru
      _
    // Predicated region
    $region22: #{small_ann_forward.1} parent=1 // pred_check
      _
    $region23: #{small_ann_forward.1} parent=1 // pred_check_branch
      %43 = sbr.rel (0) target = $region25
    $region24: #{small_ann_forward.1} parent=1 // pred_region
      %45 = dma.done [#allocation4], 256
    $region25: #{small_ann_forward.1} parent=1 // pred_fallthru
      _
    // Predicated region
    $region26: #{small_ann_forward.1} parent=1 // pred_check
      _
    $region27: #{small_ann_forward.1} parent=1 // pred_check_branch
      %47 = sbr.rel (0) target = $region29
    $region28: #{small_ann_forward.1} parent=1 // pred_region
      %49 = dma.done [#allocation6], 128
    $region29: #{small_ann_forward.1} parent=1 // pred_fallthru
      _
    %v50 = vld [vmem:[%s0] sm:$0xff]
    %v51 = vld [vmem:[#allocation3] ss:$2 sm:$0xff]
    %53 = vset.pattern.permute.xlu0 0
    %54 = vperm.xlu0 %53, %v50
    %v55 = vpop.permute.xlu0 %54
    %v58 = vperm.slane %v51, 0
    %v59 = vperm.slane %v51, 1
    %v60 = vperm.slane %v51, 2
    %v61 = vperm.slane %v51, 3
    %v62 = vperm.slane %v51, 4
    %v63 = vperm.slane %v51, 5
    %v64 = vperm.slane %v51, 6
    %v65 = vperm.slane %v51, 7
    %v74 = vmul.f32 %v55, %v58
    %v75 = vmul.f32 %v55, %v59
    %v76 = vmul.f32 %v55, %v60
    %v77 = vmul.f32 %v55, %v61
    %v78 = vmul.f32 %v55, %v62
    %v79 = vmul.f32 %v55, %v63
    %v80 = vmul.f32 %v55, %v64
    %v81 = vmul.f32 %v55, %v65
    %s82 = scalar_lea.vmem [#allocation3], 1
    %v83 = vld [vmem:[%s82] ss:$2 sm:$0xff]
    %84 = vset.pattern.permute.xlu0 1
    %85 = vperm.xlu0 %84, %v50
    %v86 = vpop.permute.xlu0 %85
    %v89 = vperm.slane %v83, 0
    %v90 = vperm.slane %v83, 1
    %v91 = vperm.slane %v83, 2
    %v92 = vperm.slane %v83, 3
    %v93 = vperm.slane %v83, 4
    %v94 = vperm.slane %v83, 5
    %v95 = vperm.slane %v83, 6
    %v96 = vperm.slane %v83, 7
    %v105 = vmul.f32 %v86, %v89
    %v106 = vmul.f32 %v86, %v90
    %v107 = vmul.f32 %v86, %v91
    %v108 = vmul.f32 %v86, %v92
    %v109 = vmul.f32 %v86, %v93
    %v110 = vmul.f32 %v86, %v94
    %v111 = vmul.f32 %v86, %v95
    %v112 = vmul.f32 %v86, %v96
    %v113 = vadd.f32 %v74, %v105
    %v114 = vadd.f32 %v75, %v106
    %v115 = vadd.f32 %v76, %v107
    %v116 = vadd.f32 %v77, %v108
    %v117 = vadd.f32 %v78, %v109
    %v118 = vadd.f32 %v79, %v110
    %v119 = vadd.f32 %v80, %v111
    %v120 = vadd.f32 %v81, %v112
    %v121 = vld [vmem:[%s2] sm:$0xff]
    %v123 = vperm.slane %v121, 0
    %v124 = vperm.slane %v121, 1
    %v125 = vperm.slane %v121, 2
    %v126 = vperm.slane %v121, 3
    %v127 = vperm.slane %v121, 4
    %v128 = vperm.slane %v121, 5
    %v129 = vperm.slane %v121, 6
    %v130 = vperm.slane %v121, 7
    %v139 = vadd.f32 %v113, %v123
    %v140 = vadd.f32 %v114, %v124
    %v141 = vadd.f32 %v115, %v125
    %v142 = vadd.f32 %v116, %v126
    %v143 = vadd.f32 %v117, %v127
    %v144 = vadd.f32 %v118, %v128
    %v145 = vadd.f32 %v119, %v129
    %v146 = vadd.f32 %v120, %v130
    %v147 = vmax.f32 %v139, 0.0
    %v148 = vmax.f32 %v140, 0.0
    %v149 = vmax.f32 %v141, 0.0
    %v150 = vmax.f32 %v142, 0.0
    %v151 = vmax.f32 %v143, 0.0
    %v152 = vmax.f32 %v144, 0.0
    %v153 = vmax.f32 %v145, 0.0
    %v154 = vmax.f32 %v146, 0.0
    %v155 = vld [vmem:[#allocation5] sm:$0xff]
    %v157 = vperm.slane %v155, 0
    %v158 = vperm.slane %v155, 1
    %v159 = vperm.slane %v155, 2
    %v160 = vperm.slane %v155, 3
    %v161 = vperm.slane %v155, 4
    %v162 = vperm.slane %v155, 5
    %v163 = vperm.slane %v155, 6
    %v164 = vperm.slane %v155, 7
    %v173 = vmul.f32 %v147, %v157
    %v174 = vmul.f32 %v148, %v158
    %v175 = vmul.f32 %v149, %v159
    %v176 = vmul.f32 %v150, %v160
    %v177 = vmul.f32 %v151, %v161
    %v178 = vmul.f32 %v152, %v162
    %v179 = vmul.f32 %v153, %v163
    %v180 = vmul.f32 %v154, %v164
    %v181 = vadd.f32 %v173, %v174
    %v182 = vadd.f32 %v181, %v175
    %v183 = vadd.f32 %v182, %v176
    %v184 = vadd.f32 %v183, %v177
    %v185 = vadd.f32 %v184, %v178
    %v186 = vadd.f32 %v185, %v179
    %v187 = vadd.f32 %v186, %v180
    %188 = vadd.xlane.f32.xlu0 %v187
    %v189 = vpop.xlane.xlu0 %188
    %v190 = vld [vmem:[#allocation2] sm:$0x1]
    %v192 = vperm.slane %v190, 0
    %v194 = vadd.f32 %v189, %v192
    %v195 = vxor.u32 %v194, 2147483648
    %v196 = vmul.f32 %v195, 1.442695
    %v197 = vpow.pop %v196
    %v198 = vadd.f32 %v197, 1.0
    %v199 = vrcp.pop %v198
    %v200 = vmul.f32 %v198, %v199
    %v201 = vsub.f32 1.0, %v200
    %v202 = vmul.f32 %v199, %v201
    %v203 = vadd.f32 %v199, %v202
    %vm204 = vweird.f32 %v198
    %vm205 = vweird.f32 %v199
    %vm206 = vmor %vm204, %vm205
    %v207 = vsel %vm206, %v199, %v203
    %v208 = vand.u32 2147483647, %v198
    %vm209 = vcmp.eq.f32.partialorder %v208, 8.507059e+37
    %v210 = vand.u32 %v198, 2147483648
    %v211 = vor.u32 1.1754944e-38, %v210
    %v212 = vsel %vm209, %v211, %v207
    %v213 = vmul.f32 1.0, %v212
    %vm214 = vcmask 7168
    %215 = vst.msk [vmem:[%s5] sm:$0xff] %vm214, %v213
    // Predicated region
    $region30: #{small_ann_forward.1} parent=1 // pred_check
      _
    $region31: #{small_ann_forward.1} parent=1 // pred_check_branch
      %217 = sbr.rel (0) target = $region33
    $region32: #{small_ann_forward.1} parent=1 // pred_region
      _
    $region33: #{small_ann_forward.1} parent=1 // pred_fallthru
      _
    // Predicated region
    $region34: #{small_ann_forward.1} parent=1 // pred_check
      _
    $region35: #{small_ann_forward.1} parent=1 // pred_check_branch
      %219 = sbr.rel (0) target = $region37
    $region36: #{small_ann_forward.1} parent=1 // pred_region
      _
    $region37: #{small_ann_forward.1} parent=1 // pred_fallthru
      _
    %220 = vsyncpa [#allocation4], 1
    %221 = vsyncpa [#allocation6], 1

</llo_original>
